<compile_context>
chip_gen: v6e
topology: v6e:2x2x1
jax: 0.10.0
libtpu: 0.0.40
codegen_flags: <defaults>
</compile_context>

<pallas_src>
import jax
import jax.numpy as jnp
from jax.experimental import pallas as pl
from jax.experimental.pallas import tpu as pltpu


def ms_cam_kernel(x_ref,
                  w1l_ref, b1l_ref, w2l_ref, b2l_ref,
                  w1g_ref, b1g_ref, w2g_ref, b2g_ref,
                  o_ref):
    """One batch element per grid step.

    x_ref  : (1, L, D)  input, channel-last (D on the lane axis)
    w1*    : (D, I)     folded conv1+BN weight, transposed for right-multiply
    b1*    : (1, I)     folded conv1+BN bias (lane-dense row vector)
    w2*    : (I, D)     folded conv2+BN weight, transposed
    b2*    : (1, D)     folded conv2+BN bias
    o_ref  : (1, L, D)  sigmoid attention weights
    """
    x = x_ref[0]                                                       # (L, D)

    # Local branch: pointwise MLP applied to every position (one matmul pair).
    hl = jnp.maximum(
        jnp.dot(x, w1l_ref[...], preferred_element_type=jnp.float32)
        + b1l_ref[...], 0.0)                                           # (L, I)
    xl = (jnp.dot(hl, w2l_ref[...], preferred_element_type=jnp.float32)
          + b2l_ref[...])                                              # (L, D)

    # Global branch: AdaptiveAvgPool1d(1) == mean over L, then the MLP.
    xm = jnp.mean(x, axis=0, keepdims=True)                            # (1, D)
    hg = jnp.maximum(
        jnp.dot(xm, w1g_ref[...], preferred_element_type=jnp.float32)
        + b1g_ref[...], 0.0)                                           # (1, I)
    xg = (jnp.dot(hg, w2g_ref[...], preferred_element_type=jnp.float32)
          + b2g_ref[...])                                              # (1, D)

    # w = sigmoid(xl + xg); the (1, D) global logits broadcast over L.
    z = xl + xg                                                        # (L, D)
    w = pl.reciprocal(1.0 + jnp.exp(-z), approx=True)
    o_ref[0] = w.astype(o_ref.dtype)


def ms_cam_forward(x, params):
    """x: (B, dim, L) in the PyTorch layout. Returns sigmoid weights, same shape."""
    B, D, L = x.shape
    w1l, b1l, w2l, b2l, w1g, b1g, w2g, b2g = params

    # Lane-dense layout: channels (dim) on the lane axis (layout plumbing only).
    x_t = jnp.transpose(x, (0, 2, 1))                                  # (B, L, D)

    def resident(a):  # weights/biases: same (whole-array) block every grid step
        return pl.BlockSpec(a.shape, lambda b, _nd=a.ndim: (0,) * _nd)

    out_t = pl.pallas_call(
        ms_cam_kernel,
        out_shape=jax.ShapeDtypeStruct((B, L, D), jnp.float32),
        grid=(B,),
        in_specs=[pl.BlockSpec((1, L, D), lambda b: (b, 0, 0))]
        + [resident(a) for a in (w1l, b1l, w2l, b2l, w1g, b1g, w2g, b2g)],
        out_specs=pl.BlockSpec((1, L, D), lambda b: (b, 0, 0)),
        compiler_params=pltpu.CompilerParams(
            dimension_semantics=("parallel",)),
    )(x_t, w1l, b1l, w2l, b2l, w1g, b1g, w2g, b2g)

    return jnp.transpose(out_t, (0, 2, 1))                             # (B, dim, L)


# ---------------------------------------------------------------------------
# Parameter construction (raw Conv1d + BatchNorm1d params) and eval-mode fold.
# ---------------------------------------------------------------------------
def init_raw_branch(key, dim, inter):
    ks = jax.random.split(key, 12)
    k1 = 1.0 / jnp.sqrt(jnp.float32(dim))
    k2 = 1.0 / jnp.sqrt(jnp.float32(inter))
    W1 = jax.random.uniform(ks[0], (inter, dim), jnp.float32, -k1, k1)
    b1 = jax.random.uniform(ks[1], (inter,), jnp.float32, -k1, k1)
    g1 = jax.random.uniform(ks[2], (inter,), jnp.float32, 0.5, 1.5)
    be1 = jax.random.uniform(ks[3], (inter,), jnp.float32, -0.1, 0.1)
    rm1 = jax.random.uniform(ks[4], (inter,), jnp.float32, -0.1, 0.1)
    rv1 = jax.random.uniform(ks[5], (inter,), jnp.float32, 0.5, 1.5)
    W2 = jax.random.uniform(ks[6], (dim, inter), jnp.float32, -k2, k2)
    b2 = jax.random.uniform(ks[7], (dim,), jnp.float32, -k2, k2)
    g2 = jax.random.uniform(ks[8], (dim,), jnp.float32, 0.5, 1.5)
    be2 = jax.random.uniform(ks[9], (dim,), jnp.float32, -0.1, 0.1)
    rm2 = jax.random.uniform(ks[10], (dim,), jnp.float32, -0.1, 0.1)
    rv2 = jax.random.uniform(ks[11], (dim,), jnp.float32, 0.5, 1.5)
    return (W1, b1, g1, be1, rm1, rv1, W2, b2, g2, be2, rm2, rv2)


def fold_branch(raw, eps=1e-5):
    """Fold eval-mode BatchNorm1d into the 1x1 convs; transpose for right-multiply."""
    (W1, b1, g1, be1, rm1, rv1, W2, b2, g2, be2, rm2, rv2) = raw
    s1 = g1 / jnp.sqrt(rv1 + eps)
    W1e = W1 * s1[:, None]                      # (inter, dim)
    c1 = (b1 - rm1) * s1 + be1                  # (inter,)
    s2 = g2 / jnp.sqrt(rv2 + eps)
    W2e = W2 * s2[:, None]                      # (dim, inter)
    c2 = (b2 - rm2) * s2 + be2                  # (dim,)
    return W1e.T, c1[None, :], W2e.T, c2[None, :]


def ms_cam_reference(x, raw_local, raw_global, eps=1e-5):
    """Plain-JAX eval-mode forward matching the PyTorch module (unfolded params)."""
    def bn(y, g, be, rm, rv):
        return ((y - rm[None, :, None]) / jnp.sqrt(rv + eps)[None, :, None]
                * g[None, :, None] + be[None, :, None])

    def mlp(z, raw):  # z: (B, C, L)
        (W1, b1, g1, be1, rm1, rv1, W2, b2, g2, be2, rm2, rv2) = raw
        h = jnp.einsum('oc,bcl->bol', W1, z) + b1[None, :, None]
        h = jnp.maximum(bn(h, g1, be1, rm1, rv1), 0.0)
        y = jnp.einsum('oc,bcl->bol', W2, h) + b2[None, :, None]
        return bn(y, g2, be2, rm2, rv2)

    xl = mlp(x, raw_local)
    xg = mlp(jnp.mean(x, axis=2, keepdims=True), raw_global)
    return jax.nn.sigmoid(xl + xg)


if __name__ == "__main__":
    B, dim, L, r = 2, 128, 16, 4
    inter = dim // r

    key = jax.random.PRNGKey(0)
    kx, kl, kg = jax.random.split(key, 3)
    x = jax.random.normal(kx, (B, dim, L), jnp.float32)
    raw_local = init_raw_branch(kl, dim, inter)
    raw_global = init_raw_branch(kg, dim, inter)
    params = fold_branch(raw_local) + fold_branch(raw_global)

    out = ms_cam_forward(x, params)
    out = jax.block_until_ready(out)

    ref = ms_cam_reference(x, raw_local, raw_global)
    assert out.shape == x.shape
    # approx reciprocal in the sigmoid => ~1e-4 relative error; allow 2e-3.
    assert jnp.allclose(out, ref, atol=2e-3, rtol=2e-3), "mismatch vs reference"
    print("KERNEL_OK")
</pallas_src>

<mosaic_0001>
module attributes {stable_mosaic.version = 11 : i64} {
  func.func @ms_cam_kernel(%arg0: i32, %arg1: memref<1x16x128xf32, #tpu.memory_space<vmem>>, %arg2: memref<128x32xf32, #tpu.memory_space<vmem>>, %arg3: memref<1x32xf32, #tpu.memory_space<vmem>>, %arg4: memref<32x128xf32, #tpu.memory_space<vmem>>, %arg5: memref<1x128xf32, #tpu.memory_space<vmem>>, %arg6: memref<128x32xf32, #tpu.memory_space<vmem>>, %arg7: memref<1x32xf32, #tpu.memory_space<vmem>>, %arg8: memref<32x128xf32, #tpu.memory_space<vmem>>, %arg9: memref<1x128xf32, #tpu.memory_space<vmem>>, %arg10: memref<1x16x128xf32, #tpu.memory_space<vmem>>) attributes {dimension_semantics = [#tpu.dimension_semantics<parallel>], iteration_bounds = array<i64: 2>, scalar_prefetch = 0 : i64, scratch_operands = 0 : i64, tpu.core_type = #tpu.core_type<tc>, window_params = [{transform_indices = @transform_0, window_bounds = array<i64: 1, 16, 128>}, {pipeline_mode = #tpu.pipeline_mode<synchronous>, transform_indices = @transform_1, window_bounds = array<i64: 128, 32>}, {pipeline_mode = #tpu.pipeline_mode<synchronous>, transform_indices = @transform_2, window_bounds = array<i64: 1, 32>}, {pipeline_mode = #tpu.pipeline_mode<synchronous>, transform_indices = @transform_3, window_bounds = array<i64: 32, 128>}, {pipeline_mode = #tpu.pipeline_mode<synchronous>, transform_indices = @transform_4, window_bounds = array<i64: 1, 128>}, {pipeline_mode = #tpu.pipeline_mode<synchronous>, transform_indices = @transform_5, window_bounds = array<i64: 128, 32>}, {pipeline_mode = #tpu.pipeline_mode<synchronous>, transform_indices = @transform_6, window_bounds = array<i64: 1, 32>}, {pipeline_mode = #tpu.pipeline_mode<synchronous>, transform_indices = @transform_7, window_bounds = array<i64: 32, 128>}, {pipeline_mode = #tpu.pipeline_mode<synchronous>, transform_indices = @transform_8, window_bounds = array<i64: 1, 128>}, {transform_indices = @transform_9, window_bounds = array<i64: 1, 16, 128>}]} {
    %c0 = arith.constant 0 : index
    %c0_0 = arith.constant 0 : index
    %c0_1 = arith.constant 0 : index
    %0 = vector.load %arg1[%c0, %c0_0, %c0_1] : memref<1x16x128xf32, #tpu.memory_space<vmem>>, vector<1x16x128xf32>
    %1 = vector.shape_cast %0 : vector<1x16x128xf32> to vector<16x128xf32>
    %c0_2 = arith.constant 0 : index
    %c0_3 = arith.constant 0 : index
    %2 = vector.load %arg2[%c0_2, %c0_3] : memref<128x32xf32, #tpu.memory_space<vmem>>, vector<128x32xf32>
    %cst = arith.constant dense<0.000000e+00> : vector<16x32xf32>
    %3 = tpu.matmul %1, %2, %cst {dimension_numbers = #tpu.dot_dimension_numbers<[1], [0], [0], [1], [0, 0, 1, 1], [], []>} : vector<16x128xf32>, vector<128x32xf32>, vector<16x32xf32> -> vector<16x32xf32>
    %c0_4 = arith.constant 0 : index
    %c0_5 = arith.constant 0 : index
    %4 = vector.load %arg3[%c0_4, %c0_5] : memref<1x32xf32, #tpu.memory_space<vmem>>, vector<1x32xf32>
    %5 = vector.broadcast %4 : vector<1x32xf32> to vector<16x32xf32>
    %6 = arith.addf %3, %5 : vector<16x32xf32>
    %cst_6 = arith.constant 0.000000e+00 : f32
    %7 = vector.broadcast %cst_6 : f32 to vector<16x32xf32>
    %8 = arith.maximumf %6, %7 : vector<16x32xf32>
    %c0_7 = arith.constant 0 : index
    %c0_8 = arith.constant 0 : index
    %9 = vector.load %arg4[%c0_7, %c0_8] : memref<32x128xf32, #tpu.memory_space<vmem>>, vector<32x128xf32>
    %cst_9 = arith.constant dense<0.000000e+00> : vector<16x128xf32>
    %10 = tpu.matmul %8, %9, %cst_9 {dimension_numbers = #tpu.dot_dimension_numbers<[1], [0], [0], [1], [0, 0, 1, 1], [], []>} : vector<16x32xf32>, vector<32x128xf32>, vector<16x128xf32> -> vector<16x128xf32>
    %c0_10 = arith.constant 0 : index
    %c0_11 = arith.constant 0 : index
    %11 = vector.load %arg5[%c0_10, %c0_11] : memref<1x128xf32, #tpu.memory_space<vmem>>, vector<1x128xf32>
    %12 = vector.broadcast %11 : vector<1x128xf32> to vector<16x128xf32>
    %13 = arith.addf %10, %12 : vector<16x128xf32>
    %cst_12 = arith.constant dense<0.000000e+00> : vector<128xf32>
    %14 = vector.multi_reduction <add>, %1, %cst_12 [0] : vector<16x128xf32> to vector<128xf32>
    %15 = vector.shape_cast %14 : vector<128xf32> to vector<1x128xf32>
    %cst_13 = arith.constant 1.600000e+01 : f32
    %16 = vector.broadcast %cst_13 : f32 to vector<1x128xf32>
    %17 = arith.divf %15, %16 : vector<1x128xf32>
    %c0_14 = arith.constant 0 : index
    %c0_15 = arith.constant 0 : index
    %18 = vector.load %arg6[%c0_14, %c0_15] : memref<128x32xf32, #tpu.memory_space<vmem>>, vector<128x32xf32>
    %cst_16 = arith.constant dense<0.000000e+00> : vector<1x32xf32>
    %19 = tpu.matmul %17, %18, %cst_16 {dimension_numbers = #tpu.dot_dimension_numbers<[1], [0], [0], [1], [0, 0, 1, 1], [], []>} : vector<1x128xf32>, vector<128x32xf32>, vector<1x32xf32> -> vector<1x32xf32>
    %c0_17 = arith.constant 0 : index
    %c0_18 = arith.constant 0 : index
    %20 = vector.load %arg7[%c0_17, %c0_18] : memref<1x32xf32, #tpu.memory_space<vmem>>, vector<1x32xf32>
    %21 = arith.addf %19, %20 : vector<1x32xf32>
    %cst_19 = arith.constant 0.000000e+00 : f32
    %22 = vector.broadcast %cst_19 : f32 to vector<1x32xf32>
    %23 = arith.maximumf %21, %22 : vector<1x32xf32>
    %c0_20 = arith.constant 0 : index
    %c0_21 = arith.constant 0 : index
    %24 = vector.load %arg8[%c0_20, %c0_21] : memref<32x128xf32, #tpu.memory_space<vmem>>, vector<32x128xf32>
    %cst_22 = arith.constant dense<0.000000e+00> : vector<1x128xf32>
    %25 = tpu.matmul %23, %24, %cst_22 {dimension_numbers = #tpu.dot_dimension_numbers<[1], [0], [0], [1], [0, 0, 1, 1], [], []>} : vector<1x32xf32>, vector<32x128xf32>, vector<1x128xf32> -> vector<1x128xf32>
    %c0_23 = arith.constant 0 : index
    %c0_24 = arith.constant 0 : index
    %26 = vector.load %arg9[%c0_23, %c0_24] : memref<1x128xf32, #tpu.memory_space<vmem>>, vector<1x128xf32>
    %27 = arith.addf %25, %26 : vector<1x128xf32>
    %28 = vector.broadcast %27 : vector<1x128xf32> to vector<16x128xf32>
    %29 = arith.addf %13, %28 : vector<16x128xf32>
    %cst_25 = arith.constant 0.000000e+00 : f32
    %30 = vector.broadcast %cst_25 : f32 to vector<16x128xf32>
    %31 = arith.subf %30, %29 : vector<16x128xf32>
    %32 = math.exp %31 : vector<16x128xf32>
    %cst_26 = arith.constant 1.000000e+00 : f32
    %33 = vector.broadcast %cst_26 : f32 to vector<16x128xf32>
    %34 = arith.addf %33, %32 : vector<16x128xf32>
    %35 = tpu.reciprocal %34 {approx = true} : vector<16x128xf32> -> vector<16x128xf32>
    %c0_27 = arith.constant 0 : index
    %c0_28 = arith.constant 0 : index
    %c0_29 = arith.constant 0 : index
    %36 = vector.load %arg10[%c0_27, %c0_28, %c0_29] : memref<1x16x128xf32, #tpu.memory_space<vmem>>, vector<1x16x128xf32>
    %37 = vector.shape_cast %36 : vector<1x16x128xf32> to vector<16x128xf32>
    %38 = vector.shape_cast %35 : vector<16x128xf32> to vector<1x16x128xf32>
    tpu.vector_store %arg10[%c0_27, %c0_28, %c0_29], %38 {strides = array<i32>} : memref<1x16x128xf32, #tpu.memory_space<vmem>>, vector<1x16x128xf32>,
    return
  }
  func.func @transform_0(%arg0: i32) -> (i32, i32, i32) {
    %c0_i32 = arith.constant 0 : i32
    %c0_i32_0 = arith.constant 0 : i32
    %c0_i32_1 = arith.constant 0 : i32
    return %arg0, %c0_i32, %c0_i32_0 : i32, i32, i32
  }
  func.func @transform_1(%arg0: i32) -> (i32, i32) {
    %c0_i32 = arith.constant 0 : i32
    %c0_i32_0 = arith.constant 0 : i32
    %c0_i32_1 = arith.constant 0 : i32
    return %c0_i32, %c0_i32_0 : i32, i32
  }
  func.func @transform_2(%arg0: i32) -> (i32, i32) {
    %c0_i32 = arith.constant 0 : i32
    %c0_i32_0 = arith.constant 0 : i32
    %c0_i32_1 = arith.constant 0 : i32
    return %c0_i32, %c0_i32_0 : i32, i32
  }
  func.func @transform_3(%arg0: i32) -> (i32, i32) {
    %c0_i32 = arith.constant 0 : i32
    %c0_i32_0 = arith.constant 0 : i32
    %c0_i32_1 = arith.constant 0 : i32
    return %c0_i32, %c0_i32_0 : i32, i32
  }
  func.func @transform_4(%arg0: i32) -> (i32, i32) {
    %c0_i32 = arith.constant 0 : i32
    %c0_i32_0 = arith.constant 0 : i32
    %c0_i32_1 = arith.constant 0 : i32
    return %c0_i32, %c0_i32_0 : i32, i32
  }
  func.func @transform_5(%arg0: i32) -> (i32, i32) {
    %c0_i32 = arith.constant 0 : i32
    %c0_i32_0 = arith.constant 0 : i32
    %c0_i32_1 = arith.constant 0 : i32
    return %c0_i32, %c0_i32_0 : i32, i32
  }
  func.func @transform_6(%arg0: i32) -> (i32, i32) {
    %c0_i32 = arith.constant 0 : i32
    %c0_i32_0 = arith.constant 0 : i32
    %c0_i32_1 = arith.constant 0 : i32
    return %c0_i32, %c0_i32_0 : i32, i32
  }
  func.func @transform_7(%arg0: i32) -> (i32, i32) {
    %c0_i32 = arith.constant 0 : i32
    %c0_i32_0 = arith.constant 0 : i32
    %c0_i32_1 = arith.constant 0 : i32
    return %c0_i32, %c0_i32_0 : i32, i32
  }
  func.func @transform_8(%arg0: i32) -> (i32, i32) {
    %c0_i32 = arith.constant 0 : i32
    %c0_i32_0 = arith.constant 0 : i32
    %c0_i32_1 = arith.constant 0 : i32
    return %c0_i32, %c0_i32_0 : i32, i32
  }
  func.func @transform_9(%arg0: i32) -> (i32, i32, i32) {
    %c0_i32 = arith.constant 0 : i32
    %c0_i32_0 = arith.constant 0 : i32
    %c0_i32_1 = arith.constant 0 : i32
    return %arg0, %c0_i32, %c0_i32_0 : i32, i32, i32
  }
}

</mosaic_0001>

<llo_original>
// kernel: tpu_custom_call.1
$region0: #{tpu_custom_call.1}
  #allocation0 [shape = 'u32[]', space=smem, size = 0x4, offset = 0x4, fixed_abs, tag = 'smem constant byte address 0x4 - core index']
  #allocation1 [shape = 'u32[144,128]{1,0:T(1,128)}', space=vmem, size = 0x12000, scoped, tag = 'internal scratch']
  %s0 = inlined_call_operand.vmem [shape: f32[2,16,128], index: 0, kind: input, shape index: {}]
  %s1 = inlined_call_operand.vmem [shape: f32[128,32], index: 1, kind: input, shape index: {}]
  %s2 = inlined_call_operand.vmem [shape: f32[1,32], index: 2, kind: input, shape index: {}]
  %s3 = inlined_call_operand.vmem [shape: f32[32,128], index: 3, kind: input, shape index: {}]
  %s4 = inlined_call_operand.vmem [shape: f32[1,128], index: 4, kind: input, shape index: {}]
  %s5 = inlined_call_operand.vmem [shape: f32[128,32], index: 5, kind: input, shape index: {}]
  %s6 = inlined_call_operand.vmem [shape: f32[1,32], index: 6, kind: input, shape index: {}]
  %s7 = inlined_call_operand.vmem [shape: f32[32,128], index: 7, kind: input, shape index: {}]
  %s8 = inlined_call_operand.vmem [shape: f32[1,128], index: 8, kind: input, shape index: {}]
  %s9 = inlined_call_operand.hbm [shape: f32[2,16,128], index: 9, kind: output, shape index: {}]
  %s10 = sld [smem:[#allocation0]]
  $region69: #{tpu_custom_call.1} parent=0
    _
  %s12 = ssub.s32 1, %s10
  %s13 = scalar_select 0, %s12, %s10
  $region1: #{tpu_custom_call.1} parent=0
    #allocation2 [shape = 'u8[16384]{0}', space=vmem, size = 0x4000, scoped, tag = 'output window, operand 0']
    #allocation3 [shape = 's32[2]{0}', space=sflag, size = 0x8, scoped, tag = 'scoped memory for tpu_custom_call.1']
    %14 = vsyncpa [#allocation3], 0
    %s15 = scalar_lea.sflag [#allocation3], 1
    %16 = vsyncpa %s15, 0
    loop: start=0, step=1, limit=4
    $region2: #{tpu_custom_call.1} parent=1 // loop_pre_header
      _
    $region3: #{tpu_custom_call.1} parent=1 // loop_header
      %s18 = sphi 0, %s22
      %p19 = scmp.ge.s32.totalorder %s18, 4
      %s28 = sphi 0, %s30
      %s31 = sphi 0, %s28
      %s32 = sphi 0, %s31
      %s48 = sphi 0, %s32
      %s52 = sphi 0, %s52
      %s54 = sphi 0, %s52
      %s55 = sphi 0, %s54
      %s69 = sphi 0, %s55
      %s73 = sphi 0, %s73
      %s75 = sphi 0, %s73
      %s76 = sphi 0, %s75
      %s90 = sphi 0, %s76
      %s94 = sphi 0, %s94
      %s96 = sphi 0, %s94
      %s97 = sphi 0, %s96
      %s111 = sphi 0, %s97
      %s115 = sphi 0, %s115
      %s117 = sphi 0, %s115
      %s118 = sphi 0, %s117
      %s132 = sphi 0, %s118
      %s136 = sphi 0, %s136
      %s138 = sphi 0, %s136
      %s139 = sphi 0, %s138
      %s153 = sphi 0, %s139
      %s157 = sphi 0, %s157
      %s159 = sphi 0, %s157
      %s160 = sphi 0, %s159
      %s174 = sphi 0, %s160
      %s178 = sphi 0, %s178
      %s180 = sphi 0, %s178
      %s181 = sphi 0, %s180
      %s195 = sphi 0, %s181
      %s199 = sphi 0, %s199
      %s201 = sphi 0, %s199
      %s202 = sphi 0, %s201
      %s216 = sphi 0, %s202
      %s222 = sphi 0, %s224
      %s225 = sphi 0, %s222
      %s226 = sphi 0, %s225
      %s242 = sphi 0, %s226
    $region4: #{tpu_custom_call.1} parent=1 // loop_header_branch
      %21 = sbr.rel (%p19) target = $region8
    $region5: #{tpu_custom_call.1} parent=1 // loop_body
      %s23 = ssub.s32 %s18, 1
      %s24 = ssub.s32 %s18, 2
      %s25 = sadd.s32 %s18, 1
      %s26 = ssub.s32 %s18, %s25
      %p27 = scmp.eq.s32.totalorder %s26, 0
      %s29 = sadd.s32 %s28, 1
      %s30 = scalar_select %p27, %s28, %s29
      %p33 = pneg %p27
      %p34 = scmp.eq.s32.totalorder %s18, 1
      %p35 = por %p33, %p34
      %p36 = scmp.ne.s32.totalorder %s28, %s31
      %p37 = scmp.eq.s32.totalorder %s18, 0
      %p38 = por %p36, %p37
      %p39 = scmp.ne.s32.totalorder %s28, %s31
      %p40 = scmp.eq.s32.totalorder %s23, 1
      %p41 = por %p39, %p40
      %p42 = scmp.ne.s32.totalorder %s31, %s32
      %p43 = scmp.eq.s32.totalorder %s23, 0
      %p44 = por %p42, %p43
      %p45 = scmp.ne.s32.totalorder %s31, %s32
      %p46 = scmp.eq.s32.totalorder %s24, 1
      %p47 = por %p45, %p46
      %p49 = scmp.ne.s32.totalorder %s32, %s48
      %p50 = scmp.eq.s32.totalorder %s24, 0
      %p51 = por %p49, %p50
      %s53 = sadd.s32 %s52, 1
      %p56 = scmp.eq.s32.totalorder %s18, 1
      %p57 = scmp.ne.s32.totalorder %s52, %s54
      %p58 = scmp.eq.s32.totalorder %s18, 0
      %p59 = por %p57, %p58
      %p60 = scmp.ne.s32.totalorder %s52, %s54
      %p61 = scmp.eq.s32.totalorder %s23, 1
      %p62 = por %p60, %p61
      %p63 = scmp.ne.s32.totalorder %s54, %s55
      %p64 = scmp.eq.s32.totalorder %s23, 0
      %p65 = por %p63, %p64
      %p66 = scmp.ne.s32.totalorder %s54, %s55
      %p67 = scmp.eq.s32.totalorder %s24, 1
      %p68 = por %p66, %p67
      %p70 = scmp.ne.s32.totalorder %s55, %s69
      %p71 = scmp.eq.s32.totalorder %s24, 0
      %p72 = por %p70, %p71
      %s74 = sadd.s32 %s73, 1
      %p77 = scmp.eq.s32.totalorder %s18, 1
      %p78 = scmp.ne.s32.totalorder %s73, %s75
      %p79 = scmp.eq.s32.totalorder %s18, 0
      %p80 = por %p78, %p79
      %p81 = scmp.ne.s32.totalorder %s73, %s75
      %p82 = scmp.eq.s32.totalorder %s23, 1
      %p83 = por %p81, %p82
      %p84 = scmp.ne.s32.totalorder %s75, %s76
      %p85 = scmp.eq.s32.totalorder %s23, 0
      %p86 = por %p84, %p85
      %p87 = scmp.ne.s32.totalorder %s75, %s76
      %p88 = scmp.eq.s32.totalorder %s24, 1
      %p89 = por %p87, %p88
      %p91 = scmp.ne.s32.totalorder %s76, %s90
      %p92 = scmp.eq.s32.totalorder %s24, 0
      %p93 = por %p91, %p92
      %s95 = sadd.s32 %s94, 1
      %p98 = scmp.eq.s32.totalorder %s18, 1
      %p99 = scmp.ne.s32.totalorder %s94, %s96
      %p100 = scmp.eq.s32.totalorder %s18, 0
      %p101 = por %p99, %p100
      %p102 = scmp.ne.s32.totalorder %s94, %s96
      %p103 = scmp.eq.s32.totalorder %s23, 1
      %p104 = por %p102, %p103
      %p105 = scmp.ne.s32.totalorder %s96, %s97
      %p106 = scmp.eq.s32.totalorder %s23, 0
      %p107 = por %p105, %p106
      %p108 = scmp.ne.s32.totalorder %s96, %s97
      %p109 = scmp.eq.s32.totalorder %s24, 1
      %p110 = por %p108, %p109
      %p112 = scmp.ne.s32.totalorder %s97, %s111
      %p113 = scmp.eq.s32.totalorder %s24, 0
      %p114 = por %p112, %p113
      %s116 = sadd.s32 %s115, 1
      %p119 = scmp.eq.s32.totalorder %s18, 1
      %p120 = scmp.ne.s32.totalorder %s115, %s117
      %p121 = scmp.eq.s32.totalorder %s18, 0
      %p122 = por %p120, %p121
      %p123 = scmp.ne.s32.totalorder %s115, %s117
      %p124 = scmp.eq.s32.totalorder %s23, 1
      %p125 = por %p123, %p124
      %p126 = scmp.ne.s32.totalorder %s117, %s118
      %p127 = scmp.eq.s32.totalorder %s23, 0
      %p128 = por %p126, %p127
      %p129 = scmp.ne.s32.totalorder %s117, %s118
      %p130 = scmp.eq.s32.totalorder %s24, 1
      %p131 = por %p129, %p130
      %p133 = scmp.ne.s32.totalorder %s118, %s132
      %p134 = scmp.eq.s32.totalorder %s24, 0
      %p135 = por %p133, %p134
      %s137 = sadd.s32 %s136, 1
      %p140 = scmp.eq.s32.totalorder %s18, 1
      %p141 = scmp.ne.s32.totalorder %s136, %s138
      %p142 = scmp.eq.s32.totalorder %s18, 0
      %p143 = por %p141, %p142
      %p144 = scmp.ne.s32.totalorder %s136, %s138
      %p145 = scmp.eq.s32.totalorder %s23, 1
      %p146 = por %p144, %p145
      %p147 = scmp.ne.s32.totalorder %s138, %s139
      %p148 = scmp.eq.s32.totalorder %s23, 0
      %p149 = por %p147, %p148
      %p150 = scmp.ne.s32.totalorder %s138, %s139
      %p151 = scmp.eq.s32.totalorder %s24, 1
      %p152 = por %p150, %p151
      %p154 = scmp.ne.s32.totalorder %s139, %s153
      %p155 = scmp.eq.s32.totalorder %s24, 0
      %p156 = por %p154, %p155
      %s158 = sadd.s32 %s157, 1
      %p161 = scmp.eq.s32.totalorder %s18, 1
      %p162 = scmp.ne.s32.totalorder %s157, %s159
      %p163 = scmp.eq.s32.totalorder %s18, 0
      %p164 = por %p162, %p163
      %p165 = scmp.ne.s32.totalorder %s157, %s159
      %p166 = scmp.eq.s32.totalorder %s23, 1
      %p167 = por %p165, %p166
      %p168 = scmp.ne.s32.totalorder %s159, %s160
      %p169 = scmp.eq.s32.totalorder %s23, 0
      %p170 = por %p168, %p169
      %p171 = scmp.ne.s32.totalorder %s159, %s160
      %p172 = scmp.eq.s32.totalorder %s24, 1
      %p173 = por %p171, %p172
      %p175 = scmp.ne.s32.totalorder %s160, %s174
      %p176 = scmp.eq.s32.totalorder %s24, 0
      %p177 = por %p175, %p176
      %s179 = sadd.s32 %s178, 1
      %p182 = scmp.eq.s32.totalorder %s18, 1
      %p183 = scmp.ne.s32.totalorder %s178, %s180
      %p184 = scmp.eq.s32.totalorder %s18, 0
      %p185 = por %p183, %p184
      %p186 = scmp.ne.s32.totalorder %s178, %s180
      %p187 = scmp.eq.s32.totalorder %s23, 1
      %p188 = por %p186, %p187
      %p189 = scmp.ne.s32.totalorder %s180, %s181
      %p190 = scmp.eq.s32.totalorder %s23, 0
      %p191 = por %p189, %p190
      %p192 = scmp.ne.s32.totalorder %s180, %s181
      %p193 = scmp.eq.s32.totalorder %s24, 1
      %p194 = por %p192, %p193
      %p196 = scmp.ne.s32.totalorder %s181, %s195
      %p197 = scmp.eq.s32.totalorder %s24, 0
      %p198 = por %p196, %p197
      %s200 = sadd.s32 %s199, 1
      %p203 = scmp.eq.s32.totalorder %s18, 1
      %p204 = scmp.ne.s32.totalorder %s199, %s201
      %p205 = scmp.eq.s32.totalorder %s18, 0
      %p206 = por %p204, %p205
      %p207 = scmp.ne.s32.totalorder %s199, %s201
      %p208 = scmp.eq.s32.totalorder %s23, 1
      %p209 = por %p207, %p208
      %p210 = scmp.ne.s32.totalorder %s201, %s202
      %p211 = scmp.eq.s32.totalorder %s23, 0
      %p212 = por %p210, %p211
      %p213 = scmp.ne.s32.totalorder %s201, %s202
      %p214 = scmp.eq.s32.totalorder %s24, 1
      %p215 = por %p213, %p214
      %p217 = scmp.ne.s32.totalorder %s202, %s216
      %p218 = scmp.eq.s32.totalorder %s24, 0
      %p219 = por %p217, %p218
      %s220 = ssub.s32 %s18, %s25
      %p221 = scmp.eq.s32.totalorder %s220, 0
      %s223 = sadd.s32 %s222, 1
      %s224 = scalar_select %p221, %s222, %s223
      %p227 = pneg %p221
      %p228 = scmp.eq.s32.totalorder %s18, 1
      %p229 = por %p227, %p228
      %p230 = scmp.ne.s32.totalorder %s222, %s225
      %p231 = scmp.eq.s32.totalorder %s18, 0
      %p232 = por %p230, %p231
      %p233 = scmp.ne.s32.totalorder %s222, %s225
      %p234 = scmp.eq.s32.totalorder %s23, 1
      %p235 = por %p233, %p234
      %p236 = scmp.ne.s32.totalorder %s225, %s226
      %p237 = scmp.eq.s32.totalorder %s23, 0
      %p238 = por %p236, %p237
      %p239 = scmp.ne.s32.totalorder %s225, %s226
      %p240 = scmp.eq.s32.totalorder %s24, 1
      %p241 = por %p239, %p240
      %p243 = scmp.ne.s32.totalorder %s226, %s242
      %p244 = scmp.eq.s32.totalorder %s24, 0
      %p245 = por %p243, %p244
      %p246 = scmp.le.s32.totalorder 1, %s18
      %p247 = scmp.lt.s32.totalorder %s18, 3
      %p248 = pnand %p246, %p247
      %p249 = pneg %p248
      // Predicated region
      $region9: #{tpu_custom_call.1} parent=5 // pred_check
        _
      $region10: #{tpu_custom_call.1} parent=5 // pred_check_branch
        %251 = sbr.rel (%p248) target = $region12
      $region11: #{tpu_custom_call.1} parent=5 // pred_region
        %s252 = ssub.s32 %s18, 1
        // Predicated region
        $region13: #{tpu_custom_call.1} parent=11 // pred_check
          %p253 = pneg %p65
        $region14: #{tpu_custom_call.1} parent=11 // pred_check_branch
          %255 = sbr.rel (%p253) target = $region16
        $region15: #{tpu_custom_call.1} parent=11 // pred_region
          _
        $region16: #{tpu_custom_call.1} parent=11 // pred_fallthru
          _
        // Predicated region
        $region17: #{tpu_custom_call.1} parent=11 // pred_check
          %p256 = pneg %p86
        $region18: #{tpu_custom_call.1} parent=11 // pred_check_branch
          %258 = sbr.rel (%p256) target = $region20
        $region19: #{tpu_custom_call.1} parent=11 // pred_region
          _
        $region20: #{tpu_custom_call.1} parent=11 // pred_fallthru
          _
        // Predicated region
        $region21: #{tpu_custom_call.1} parent=11 // pred_check
          %p259 = pneg %p107
        $region22: #{tpu_custom_call.1} parent=11 // pred_check_branch
          %261 = sbr.rel (%p259) target = $region24
        $region23: #{tpu_custom_call.1} parent=11 // pred_region
          _
        $region24: #{tpu_custom_call.1} parent=11 // pred_fallthru
          _
        // Predicated region
        $region25: #{tpu_custom_call.1} parent=11 // pred_check
          %p262 = pneg %p128
        $region26: #{tpu_custom_call.1} parent=11 // pred_check_branch
          %264 = sbr.rel (%p262) target = $region28
        $region27: #{tpu_custom_call.1} parent=11 // pred_region
          _
        $region28: #{tpu_custom_call.1} parent=11 // pred_fallthru
          _
        // Predicated region
        $region29: #{tpu_custom_call.1} parent=11 // pred_check
          %p265 = pneg %p149
        $region30: #{tpu_custom_call.1} parent=11 // pred_check_branch
          %267 = sbr.rel (%p265) target = $region32
        $region31: #{tpu_custom_call.1} parent=11 // pred_region
          _
        $region32: #{tpu_custom_call.1} parent=11 // pred_fallthru
          _
        // Predicated region
        $region33: #{tpu_custom_call.1} parent=11 // pred_check
          %p268 = pneg %p170
        $region34: #{tpu_custom_call.1} parent=11 // pred_check_branch
          %270 = sbr.rel (%p268) target = $region36
        $region35: #{tpu_custom_call.1} parent=11 // pred_region
          _
        $region36: #{tpu_custom_call.1} parent=11 // pred_fallthru
          _
        // Predicated region
        $region37: #{tpu_custom_call.1} parent=11 // pred_check
          %p271 = pneg %p191
        $region38: #{tpu_custom_call.1} parent=11 // pred_check_branch
          %273 = sbr.rel (%p271) target = $region40
        $region39: #{tpu_custom_call.1} parent=11 // pred_region
          _
        $region40: #{tpu_custom_call.1} parent=11 // pred_fallthru
          _
        // Predicated region
        $region41: #{tpu_custom_call.1} parent=11 // pred_check
          %p274 = pneg %p212
        $region42: #{tpu_custom_call.1} parent=11 // pred_check_branch
          %276 = sbr.rel (%p274) target = $region44
        $region43: #{tpu_custom_call.1} parent=11 // pred_region
          _
        $region44: #{tpu_custom_call.1} parent=11 // pred_fallthru
          _
      $region12: #{tpu_custom_call.1} parent=5 // pred_fallthru
        _
      %p277 = scmp.lt.s32.totalorder %s18, 2
      // Predicated region
      $region45: #{tpu_custom_call.1} parent=5 // pred_check
        %p278 = pneg %p277
      $region46: #{tpu_custom_call.1} parent=5 // pred_check_branch
        %280 = sbr.rel (%p278) target = $region48
      $region47: #{tpu_custom_call.1} parent=5 // pred_region
        // Predicated region
        $region49: #{tpu_custom_call.1} parent=47 // pred_check
          %p281 = pneg %p38
        $region50: #{tpu_custom_call.1} parent=47 // pred_check_branch
          %283 = sbr.rel (%p281) target = $region52
        $region51: #{tpu_custom_call.1} parent=47 // pred_region
          %p284 = scmp.lt.s32.totalorder %s18, 1
          %s285 = scalar_select %p284, %s18, 1
          %s286 = smul.addr %s285, 2
          %s287 = smul.addr %s286, 8
          %s288 = scalar_lea.vmem %s0, %s287
        $region52: #{tpu_custom_call.1} parent=47 // pred_fallthru
          _
      $region48: #{tpu_custom_call.1} parent=5 // pred_fallthru
        _
      %p289 = scmp.le.s32.totalorder 1, %s18
      %p290 = scmp.lt.s32.totalorder %s18, 3
      %p291 = pnand %p289, %p290
      %p292 = pneg %p291
      // Predicated region
      $region53: #{tpu_custom_call.1} parent=5 // pred_check
        _
      $region54: #{tpu_custom_call.1} parent=5 // pred_check_branch
        %294 = sbr.rel (%p291) target = $region56
      $region55: #{tpu_custom_call.1} parent=5 // pred_region
        %s295 = ssub.s32 %s18, 1
        %p296 = scmp.lt.s32.totalorder %s23, 1
        %s297 = scalar_select %p296, %s23, 1
        %s298 = smul.addr %s297, 2
        %s299 = smul.addr %s298, 8
        %s300 = scalar_lea.vmem %s0, %s299
        %p301 = pneg %p44
        %p302 = pneg %p41
        %p303 = pneg %p65
        %p304 = pneg %p62
        %p305 = pneg %p86
        %p306 = pneg %p83
        %p307 = pneg %p107
        %p308 = pneg %p104
        %p309 = pneg %p128
        %p310 = pneg %p125
        %p311 = pneg %p149
        %p312 = pneg %p146
        %p313 = pneg %p170
        %p314 = pneg %p167
        %p315 = pneg %p191
        %p316 = pneg %p188
        %p317 = pneg %p212
        %p318 = pneg %p209
        %p319 = pneg %p238
        %p320 = pneg %p235
        %s321 = sand.u32 %s225, 1
        %s322 = scalar_lea.sflag [#allocation3], %s321
        %s323 = sand.u32 %s225, 1
        %s324 = smul.addr %s323, 16
        %s325 = scalar_lea.vmem [#allocation2], %s324
        %p326 = scmp.lt.s32.totalorder %s23, 1
        %s327 = scalar_select %p326, %s23, 1
        %s328 = smul.addr %s327, 2
        %s329 = smul.addr %s328, 8
        %s330 = scalar_lea.vmem %s0, %s329
        %v331 = vld [vmem:[%s330] sm:$0xff]
        %v332 = vld [vmem:[%s330 + $0x8] sm:$0xff]
        %v333 = vld [vmem:[%s1] sm:$0xff]
        %v334 = vld [vmem:[%s1 + $0x8] sm:$0xff]
        %v335 = vld [vmem:[%s1 + $0x10] sm:$0xff]
        %v336 = vld [vmem:[%s1 + $0x18] sm:$0xff]
        %v337 = vld [vmem:[%s1 + $0x20] sm:$0xff]
        %v338 = vld [vmem:[%s1 + $0x28] sm:$0xff]
        %v339 = vld [vmem:[%s1 + $0x30] sm:$0xff]
        %v340 = vld [vmem:[%s1 + $0x38] sm:$0xff]
        %v341 = vld [vmem:[%s1 + $0x40] sm:$0xff]
        %v342 = vld [vmem:[%s1 + $0x48] sm:$0xff]
        %v343 = vld [vmem:[%s1 + $0x50] sm:$0xff]
        %v344 = vld [vmem:[%s1 + $0x58] sm:$0xff]
        %v345 = vld [vmem:[%s1 + $0x60] sm:$0xff]
        %v346 = vld [vmem:[%s1 + $0x68] sm:$0xff]
        %v347 = vld [vmem:[%s1 + $0x70] sm:$0xff]
        %v348 = vld [vmem:[%s1 + $0x78] sm:$0xff]
        %v349 = vld [vmem:[%s2] sm:$0x1]
        %v351 = vlaneseq
        %v352 = vshrl.u32 %v351, 7
        %v353 = vsub.s32 0, %v352
        %v354 = vrot.slane %v349, %v353
        %356 = vmatprep.subr.mxu0 0.0
        %357 = vmatpush1.msra.mxu0 %v348
        %358 = vmatprep.subr.mxu0 0.0
        %359 = vmatpush1.msra.mxu0 %v347
        %360 = vmatprep.subr.mxu0 0.0
        %361 = vmatpush1.msra.mxu0 %v346
        %362 = vmatprep.subr.mxu0 0.0
        %363 = vmatpush1.msra.mxu0 %v345
        %364 = vmatprep.subr.mxu0 0.0
        %365 = vmatpush1.msra.mxu0 %v344
        %366 = vmatprep.subr.mxu0 0.0
        %367 = vmatpush1.msra.mxu0 %v343
        %368 = vmatprep.subr.mxu0 0.0
        %369 = vmatpush1.msra.mxu0 %v342
        %370 = vmatprep.subr.mxu0 0.0
        %371 = vmatpush1.msra.mxu0 %v341
        %372 = vmatprep.subr.mxu0 0.0
        %373 = vmatpush1.msra.mxu0 %v340
        %374 = vmatprep.subr.mxu0 0.0
        %375 = vmatpush1.msra.mxu0 %v339
        %376 = vmatprep.subr.mxu0 0.0
        %377 = vmatpush1.msra.mxu0 %v338
        %378 = vmatprep.subr.mxu0 0.0
        %379 = vmatpush1.msra.mxu0 %v337
        %380 = vmatprep.subr.mxu0 0.0
        %381 = vmatpush1.msra.mxu0 %v336
        %382 = vmatprep.subr.mxu0 0.0
        %383 = vmatpush1.msra.mxu0 %v335
        %384 = vmatprep.subr.mxu0 0.0
        %385 = vmatpush1.msra.mxu0 %v334
        %386 = vmatprep.subr.mxu0 0.0
        %387 = vmatpush1.msra.mxu0 %v333
        %388 = vmatprep.subr.mxu0 0.0
        %389 = vmatpush2.msra.mxu0 0.0
        %390 = vmatprep.subr.mxu0 0.0
        %391 = vmatpush2.msra.mxu0 0.0
        %392 = vmatprep.subr.mxu0 0.0
        %393 = vmatpush2.msra.mxu0 0.0
        %394 = vmatprep.subr.mxu0 0.0
        %395 = vmatpush2.msra.mxu0 0.0
        %396 = vmatprep.subr.mxu0 0.0
        %397 = vmatpush2.msra.mxu0 0.0
        %398 = vmatprep.subr.mxu0 0.0
        %399 = vmatpush2.msra.mxu0 0.0
        %400 = vmatprep.subr.mxu0 0.0
        %401 = vmatpush2.msra.mxu0 0.0
        %402 = vmatprep.subr.mxu0 0.0
        %403 = vmatpush2.msra.mxu0 0.0
        %404 = vmatprep.subr.mxu0 0.0
        %405 = vmatpush2.msra.mxu0 0.0
        %406 = vmatprep.subr.mxu0 0.0
        %407 = vmatpush2.msra.mxu0 0.0
        %408 = vmatprep.subr.mxu0 0.0
        %409 = vmatpush2.msra.mxu0 0.0
        %410 = vmatprep.subr.mxu0 0.0
        %411 = vmatpush2.msra.mxu0 0.0
        %412 = vmatprep.subr.mxu0 0.0
        %413 = vmatpush2.msra.mxu0 0.0
        %414 = vmatprep.subr.mxu0 0.0
        %415 = vmatpush2.msra.mxu0 0.0
        %416 = vmatprep.subr.mxu0 0.0
        %417 = vmatpush2.msra.mxu0 0.0
        %418 = vmatprep.subr.mxu0 0.0
        %419 = vmatpush2.msra.mxu0 0.0
        %420 = vmatprep.mubr.f32.mxu0 0.0
        %421 = vmatmul.mubr.f32.gmra.mxu0 %v331
        %v422 = vpop.f32.mrf.mxu0
        %v423 = vadd.f32 %v354, %v422
        %v424 = vpop.f32.mrf.mxu0
        %425 = vmatprep.mubr.f32.mxu0 0.0
        %426 = vmatmul.mubr.f32.gmra.mxu0 %v332
        %v427 = vpop.f32.mrf.mxu0
        %v428 = vadd.f32 %v354, %v427
        %v429 = vpop.f32.mrf.mxu0
        %430 = vdwg.mxu0
        %v431 = vmax.f32 %v423, 0.0
        %v432 = vmax.f32 %v428, 0.0
        %v433 = vld [vmem:[%s3] sm:$0xff]
        %v434 = vld [vmem:[%s3 + $0x8] sm:$0xff]
        %v435 = vld [vmem:[%s3 + $0x10] sm:$0xff]
        %v436 = vld [vmem:[%s3 + $0x18] sm:$0xff]
        %v437 = vld [vmem:[%s4] sm:$0x1]
        %v439 = vlaneseq
        %v440 = vshrl.u32 %v439, 7
        %v441 = vsub.s32 0, %v440
        %v442 = vrot.slane %v437, %v441
        %vm444 = vcmask 261120
        %v446 = vsel %vm444, %v431, 0
        %v449 = vsel %vm444, %v432, 0
        %451 = vmatprep.subr.mxu0 0.0
        %452 = vmatpush1.msra.mxu0 0.0
        %453 = vmatprep.subr.mxu0 0.0
        %454 = vmatpush1.msra.mxu0 0.0
        %455 = vmatprep.subr.mxu0 0.0
        %456 = vmatpush1.msra.mxu0 0.0
        %457 = vmatprep.subr.mxu0 0.0
        %458 = vmatpush1.msra.mxu0 0.0
        %459 = vmatprep.subr.mxu0 0.0
        %460 = vmatpush1.msra.mxu0 0.0
        %461 = vmatprep.subr.mxu0 0.0
        %462 = vmatpush1.msra.mxu0 0.0
        %463 = vmatprep.subr.mxu0 0.0
        %464 = vmatpush1.msra.mxu0 0.0
        %465 = vmatprep.subr.mxu0 0.0
        %466 = vmatpush1.msra.mxu0 0.0
        %467 = vmatprep.subr.mxu0 0.0
        %468 = vmatpush1.msra.mxu0 0.0
        %469 = vmatprep.subr.mxu0 0.0
        %470 = vmatpush1.msra.mxu0 0.0
        %471 = vmatprep.subr.mxu0 0.0
        %472 = vmatpush1.msra.mxu0 0.0
        %473 = vmatprep.subr.mxu0 0.0
        %474 = vmatpush1.msra.mxu0 0.0
        %475 = vmatprep.subr.mxu0 0.0
        %476 = vmatpush1.msra.mxu0 %v436
        %477 = vmatprep.subr.mxu0 0.0
        %478 = vmatpush1.msra.mxu0 %v435
        %479 = vmatprep.subr.mxu0 0.0
        %480 = vmatpush1.msra.mxu0 %v434
        %481 = vmatprep.subr.mxu0 0.0
        %482 = vmatpush1.msra.mxu0 %v433
        %483 = vmatprep.subr.mxu0 0.0
        %484 = vmatpush2.msra.mxu0 0.0
        %485 = vmatprep.subr.mxu0 0.0
        %486 = vmatpush2.msra.mxu0 0.0
        %487 = vmatprep.subr.mxu0 0.0
        %488 = vmatpush2.msra.mxu0 0.0
        %489 = vmatprep.subr.mxu0 0.0
        %490 = vmatpush2.msra.mxu0 0.0
        %491 = vmatprep.subr.mxu0 0.0
        %492 = vmatpush2.msra.mxu0 0.0
        %493 = vmatprep.subr.mxu0 0.0
        %494 = vmatpush2.msra.mxu0 0.0
        %495 = vmatprep.subr.mxu0 0.0
        %496 = vmatpush2.msra.mxu0 0.0
        %497 = vmatprep.subr.mxu0 0.0
        %498 = vmatpush2.msra.mxu0 0.0
        %499 = vmatprep.subr.mxu0 0.0
        %500 = vmatpush2.msra.mxu0 0.0
        %501 = vmatprep.subr.mxu0 0.0
        %502 = vmatpush2.msra.mxu0 0.0
        %503 = vmatprep.subr.mxu0 0.0
        %504 = vmatpush2.msra.mxu0 0.0
        %505 = vmatprep.subr.mxu0 0.0
        %506 = vmatpush2.msra.mxu0 0.0
        %507 = vmatprep.subr.mxu0 0.0
        %508 = vmatpush2.msra.mxu0 0.0
        %509 = vmatprep.subr.mxu0 0.0
        %510 = vmatpush2.msra.mxu0 0.0
        %511 = vmatprep.subr.mxu0 0.0
        %512 = vmatpush2.msra.mxu0 0.0
        %513 = vmatprep.subr.mxu0 0.0
        %514 = vmatpush2.msra.mxu0 0.0
        %515 = vmatprep.mubr.f32.mxu0 0.0
        %516 = vmatmul.mubr.f32.gmra.mxu0 %v446
        %v517 = vpop.f32.mrf.mxu0
        %v518 = vadd.f32 %v442, %v517
        %v519 = vpop.f32.mrf.mxu0
        %520 = vmatprep.mubr.f32.mxu0 0.0
        %521 = vmatmul.mubr.f32.gmra.mxu0 %v449
        %v522 = vpop.f32.mrf.mxu0
        %v523 = vadd.f32 %v442, %v522
        %v524 = vpop.f32.mrf.mxu0
        %525 = vdwg.mxu0
        %v526 = vadd.f32 %v331, %v332
        %v527 = vrot.slane %v526, 4
        %v528 = vadd.f32 %v526, %v527
        %v529 = vrot.slane %v528, 2
        %v530 = vadd.f32 %v528, %v529
        %v531 = vrot.slane %v530, 1
        %v532 = vadd.f32 %v530, %v531
        %v533 = vrcp.pop 16.0
        %v534 = vmul.f32 %v532, %v533
        %v535 = vld [vmem:[%s5] sm:$0xff]
        %v536 = vld [vmem:[%s5 + $0x8] sm:$0xff]
        %v537 = vld [vmem:[%s5 + $0x10] sm:$0xff]
        %v538 = vld [vmem:[%s5 + $0x18] sm:$0xff]
        %v539 = vld [vmem:[%s5 + $0x20] sm:$0xff]
        %v540 = vld [vmem:[%s5 + $0x28] sm:$0xff]
        %v541 = vld [vmem:[%s5 + $0x30] sm:$0xff]
        %v542 = vld [vmem:[%s5 + $0x38] sm:$0xff]
        %v543 = vld [vmem:[%s5 + $0x40] sm:$0xff]
        %v544 = vld [vmem:[%s5 + $0x48] sm:$0xff]
        %v545 = vld [vmem:[%s5 + $0x50] sm:$0xff]
        %v546 = vld [vmem:[%s5 + $0x58] sm:$0xff]
        %v547 = vld [vmem:[%s5 + $0x60] sm:$0xff]
        %v548 = vld [vmem:[%s5 + $0x68] sm:$0xff]
        %v549 = vld [vmem:[%s5 + $0x70] sm:$0xff]
        %v550 = vld [vmem:[%s5 + $0x78] sm:$0xff]
        %v551 = vld [vmem:[%s6] sm:$0x1]
        %552 = vmatprep.subr.mxu0 0.0
        %553 = vmatpush1.msra.mxu0 %v550
        %554 = vmatprep.subr.mxu0 0.0
        %555 = vmatpush1.msra.mxu0 %v549
        %556 = vmatprep.subr.mxu0 0.0
        %557 = vmatpush1.msra.mxu0 %v548
        %558 = vmatprep.subr.mxu0 0.0
        %559 = vmatpush1.msra.mxu0 %v547
        %560 = vmatprep.subr.mxu0 0.0
        %561 = vmatpush1.msra.mxu0 %v546
        %562 = vmatprep.subr.mxu0 0.0
        %563 = vmatpush1.msra.mxu0 %v545
        %564 = vmatprep.subr.mxu0 0.0
        %565 = vmatpush1.msra.mxu0 %v544
        %566 = vmatprep.subr.mxu0 0.0
        %567 = vmatpush1.msra.mxu0 %v543
        %568 = vmatprep.subr.mxu0 0.0
        %569 = vmatpush1.msra.mxu0 %v542
        %570 = vmatprep.subr.mxu0 0.0
        %571 = vmatpush1.msra.mxu0 %v541
        %572 = vmatprep.subr.mxu0 0.0
        %573 = vmatpush1.msra.mxu0 %v540
        %574 = vmatprep.subr.mxu0 0.0
        %575 = vmatpush1.msra.mxu0 %v539
        %576 = vmatprep.subr.mxu0 0.0
        %577 = vmatpush1.msra.mxu0 %v538
        %578 = vmatprep.subr.mxu0 0.0
        %579 = vmatpush1.msra.mxu0 %v537
        %580 = vmatprep.subr.mxu0 0.0
        %581 = vmatpush1.msra.mxu0 %v536
        %582 = vmatprep.subr.mxu0 0.0
        %583 = vmatpush1.msra.mxu0 %v535
        %584 = vmatprep.subr.mxu0 0.0
        %585 = vmatpush2.msra.mxu0 0.0
        %586 = vmatprep.subr.mxu0 0.0
        %587 = vmatpush2.msra.mxu0 0.0
        %588 = vmatprep.subr.mxu0 0.0
        %589 = vmatpush2.msra.mxu0 0.0
        %590 = vmatprep.subr.mxu0 0.0
        %591 = vmatpush2.msra.mxu0 0.0
        %592 = vmatprep.subr.mxu0 0.0
        %593 = vmatpush2.msra.mxu0 0.0
        %594 = vmatprep.subr.mxu0 0.0
        %595 = vmatpush2.msra.mxu0 0.0
        %596 = vmatprep.subr.mxu0 0.0
        %597 = vmatpush2.msra.mxu0 0.0
        %598 = vmatprep.subr.mxu0 0.0
        %599 = vmatpush2.msra.mxu0 0.0
        %600 = vmatprep.subr.mxu0 0.0
        %601 = vmatpush2.msra.mxu0 0.0
        %602 = vmatprep.subr.mxu0 0.0
        %603 = vmatpush2.msra.mxu0 0.0
        %604 = vmatprep.subr.mxu0 0.0
        %605 = vmatpush2.msra.mxu0 0.0
        %606 = vmatprep.subr.mxu0 0.0
        %607 = vmatpush2.msra.mxu0 0.0
        %608 = vmatprep.subr.mxu0 0.0
        %609 = vmatpush2.msra.mxu0 0.0
        %610 = vmatprep.subr.mxu0 0.0
        %611 = vmatpush2.msra.mxu0 0.0
        %612 = vmatprep.subr.mxu0 0.0
        %613 = vmatpush2.msra.mxu0 0.0
        %614 = vmatprep.subr.mxu0 0.0
        %615 = vmatpush2.msra.mxu0 0.0
        %616 = vmatprep.mubr.f32.mxu0 0.0
        %617 = vmatmul.mubr.f32.gmra.mxu0 %v534
        %v618 = vpop.f32.mrf.mxu0
        %v619 = vadd.f32 %v551, %v618
        %v620 = vpop.f32.mrf.mxu0
        %621 = vdwg.mxu0
        %v622 = vmax.f32 %v619, 0.0
        %v623 = vld [vmem:[%s7] sm:$0xff]
        %v624 = vld [vmem:[%s7 + $0x8] sm:$0xff]
        %v625 = vld [vmem:[%s7 + $0x10] sm:$0xff]
        %v626 = vld [vmem:[%s7 + $0x18] sm:$0xff]
        %v627 = vld [vmem:[%s8] sm:$0x1]
        %v629 = vsel %vm444, %v622, 0
        %631 = vmatprep.subr.mxu0 0.0
        %632 = vmatpush1.msra.mxu0 0.0
        %633 = vmatprep.subr.mxu0 0.0
        %634 = vmatpush1.msra.mxu0 0.0
        %635 = vmatprep.subr.mxu0 0.0
        %636 = vmatpush1.msra.mxu0 0.0
        %637 = vmatprep.subr.mxu0 0.0
        %638 = vmatpush1.msra.mxu0 0.0
        %639 = vmatprep.subr.mxu0 0.0
        %640 = vmatpush1.msra.mxu0 0.0
        %641 = vmatprep.subr.mxu0 0.0
        %642 = vmatpush1.msra.mxu0 0.0
        %643 = vmatprep.subr.mxu0 0.0
        %644 = vmatpush1.msra.mxu0 0.0
        %645 = vmatprep.subr.mxu0 0.0
        %646 = vmatpush1.msra.mxu0 0.0
        %647 = vmatprep.subr.mxu0 0.0
        %648 = vmatpush1.msra.mxu0 0.0
        %649 = vmatprep.subr.mxu0 0.0
        %650 = vmatpush1.msra.mxu0 0.0
        %651 = vmatprep.subr.mxu0 0.0
        %652 = vmatpush1.msra.mxu0 0.0
        %653 = vmatprep.subr.mxu0 0.0
        %654 = vmatpush1.msra.mxu0 0.0
        %655 = vmatprep.subr.mxu0 0.0
        %656 = vmatpush1.msra.mxu0 %v626
        %657 = vmatprep.subr.mxu0 0.0
        %658 = vmatpush1.msra.mxu0 %v625
        %659 = vmatprep.subr.mxu0 0.0
        %660 = vmatpush1.msra.mxu0 %v624
        %661 = vmatprep.subr.mxu0 0.0
        %662 = vmatpush1.msra.mxu0 %v623
        %663 = vmatprep.subr.mxu0 0.0
        %664 = vmatpush2.msra.mxu0 0.0
        %665 = vmatprep.subr.mxu0 0.0
        %666 = vmatpush2.msra.mxu0 0.0
        %667 = vmatprep.subr.mxu0 0.0
        %668 = vmatpush2.msra.mxu0 0.0
        %669 = vmatprep.subr.mxu0 0.0
        %670 = vmatpush2.msra.mxu0 0.0
        %671 = vmatprep.subr.mxu0 0.0
        %672 = vmatpush2.msra.mxu0 0.0
        %673 = vmatprep.subr.mxu0 0.0
        %674 = vmatpush2.msra.mxu0 0.0
        %675 = vmatprep.subr.mxu0 0.0
        %676 = vmatpush2.msra.mxu0 0.0
        %677 = vmatprep.subr.mxu0 0.0
        %678 = vmatpush2.msra.mxu0 0.0
        %679 = vmatprep.subr.mxu0 0.0
        %680 = vmatpush2.msra.mxu0 0.0
        %681 = vmatprep.subr.mxu0 0.0
        %682 = vmatpush2.msra.mxu0 0.0
        %683 = vmatprep.subr.mxu0 0.0
        %684 = vmatpush2.msra.mxu0 0.0
        %685 = vmatprep.subr.mxu0 0.0
        %686 = vmatpush2.msra.mxu0 0.0
        %687 = vmatprep.subr.mxu0 0.0
        %688 = vmatpush2.msra.mxu0 0.0
        %689 = vmatprep.subr.mxu0 0.0
        %690 = vmatpush2.msra.mxu0 0.0
        %691 = vmatprep.subr.mxu0 0.0
        %692 = vmatpush2.msra.mxu0 0.0
        %693 = vmatprep.subr.mxu0 0.0
        %694 = vmatpush2.msra.mxu0 0.0
        %695 = vmatprep.mubr.f32.mxu0 0.0
        %696 = vmatmul.mubr.f32.gmra.mxu0 %v629
        %v697 = vpop.f32.mrf.mxu0
        %v698 = vadd.f32 %v627, %v697
        %v699 = vpop.f32.mrf.mxu0
        %700 = vdwg.mxu0
        %v701 = vlaneseq
        %v702 = vshrl.u32 %v701, 7
        %v703 = vsub.s32 0, %v702
        %v704 = vrot.slane %v698, %v703
        %v705 = vadd.f32 %v518, %v704
        %v706 = vadd.f32 %v523, %v704
        %v707 = vsub.f32 0.0, %v705
        %v708 = vsub.f32 0.0, %v706
        %v709 = vmul.f32 %v707, 1.442695
        %v710 = vpow.pop %v709
        %v711 = vmul.f32 %v708, 1.442695
        %v712 = vpow.pop %v711
        %v713 = vadd.f32 %v710, 1.0
        %v714 = vadd.f32 %v712, 1.0
        %v715 = vrcp.pop %v713
        %v716 = vrcp.pop %v714
        %717 = vst [vmem:[%s325] sm:$0xff] %v715
        %718 = vst [vmem:[%s325 + $0x8] sm:$0xff] %v716
        %s719 = sand.u32 %s225, 1
        %s720 = scalar_lea.sflag [#allocation3], %s719
        %s721 = sand.u32 %s225, 1
        %s722 = smul.addr %s721, 16
        %s723 = scalar_lea.vmem [#allocation2], %s722
        // Predicated region
        $region57: #{tpu_custom_call.1} parent=55 // pred_check
          %p724 = pneg %p235
        $region58: #{tpu_custom_call.1} parent=55 // pred_check_branch
          %726 = sbr.rel (%p724) target = $region60
        $region59: #{tpu_custom_call.1} parent=55 // pred_region
          %s728 = ssub.s32 256, 256
          %729 = vsyncadd %s720, %s728
          %s730 = smul.addr %s23, 2
          %s731 = smul.addr %s730, 128
          %s732 = scalar_lea.hbm %s9, %s731
          %s733 = sshll.u32 %s723, 4
          %s734 = int_to_ptr.vmem [resolvable:$true] %s733
          %739 = dma.vmem_to_hbm [thread:$0]  %s734, 256, %s732, %s720, 128, 128, 8
        $region60: #{tpu_custom_call.1} parent=55 // pred_fallthru
          _
      $region56: #{tpu_custom_call.1} parent=5 // pred_fallthru
        _
      %p740 = scmp.le.s32.totalorder 2, %s18
      // Predicated region
      $region61: #{tpu_custom_call.1} parent=5 // pred_check
        %p741 = pneg %p740
      $region62: #{tpu_custom_call.1} parent=5 // pred_check_branch
        %743 = sbr.rel (%p741) target = $region64
      $region63: #{tpu_custom_call.1} parent=5 // pred_region
        %s744 = ssub.s32 %s18, 2
        // Predicated region
        $region65: #{tpu_custom_call.1} parent=63 // pred_check
          %p745 = pneg %p241
        $region66: #{tpu_custom_call.1} parent=63 // pred_check_branch
          %747 = sbr.rel (%p745) target = $region68
        $region67: #{tpu_custom_call.1} parent=63 // pred_region
          %s748 = sand.u32 %s226, 1
          %s749 = scalar_lea.sflag [#allocation3], %s748
          %s750 = sand.u32 %s226, 1
          %s751 = smul.addr %s750, 16
          %s752 = scalar_lea.vmem [#allocation2], %s751
          %753 = dma.done %s749, 256
        $region68: #{tpu_custom_call.1} parent=63 // pred_fallthru
          _
      $region64: #{tpu_custom_call.1} parent=5 // pred_fallthru
        _
    $region6: #{tpu_custom_call.1} parent=1 // loop_footer
      %s22 = sadd.s32 1, %s18
    $region7: #{tpu_custom_call.1} parent=1 // loop_footer_branch
      %17 = sbr.rel target = $region3
    $region8: #{tpu_custom_call.1} parent=1 // loop_exit
      _
    %754 = vsyncpa [#allocation3], 1
    %s755 = scalar_lea.sflag [#allocation3], 1
    %756 = vsyncpa %s755, 1

</llo_original>
